<compile_context>
chip_gen: v5e
topology: v5e:2x2
jax: 0.10.0
libtpu: 0.0.40
codegen_flags: <defaults>
</compile_context>

<pallas_src>
import jax
import jax.numpy as jnp
from jax.experimental import pallas as pl
from jax.experimental.pallas import tpu as pltpu


def _conv2dlayer_kernel(x_ref, w_ref, o_ref):
    # x_ref: (1, C) VMEM   w_ref: (K, C) VMEM   o_ref: (1,) SMEM (f32 scalar)
    c = x_ref.shape[1]
    x = x_ref[...]
    w = w_ref[...]
    # Keep math in f32 (only casts if inputs are narrower; trace-time check).
    if x.dtype != jnp.float32:
        x = x.astype(jnp.float32)
    if w.dtype != jnp.float32:
        w = w.astype(jnp.float32)
    # Sublane (K) reduce first -> one (1, C) row, then C multiplies and a
    # single cross-lane reduce.
    colsum = jnp.sum(w, axis=0, keepdims=True)            # (1, C)
    o_ref[0] = jnp.float32(c) * jnp.sum(x * colsum)


def conv2dlayer_forward(x, weight):
    """x: (C,) vector, weight: (K, C). Returns scalar f32 (shape ())."""
    C = x.shape[0]
    K = weight.shape[0]
    assert weight.shape[1] == C, "torch.dot requires equal lengths"

    x2d = x.reshape(1, C)

    out = pl.pallas_call(
        _conv2dlayer_kernel,
        out_shape=jax.ShapeDtypeStruct((1,), jnp.float32),
        in_specs=[
            pl.BlockSpec(memory_space=pltpu.VMEM),   # x  (1, C)
            pl.BlockSpec(memory_space=pltpu.VMEM),   # w  (K, C)
        ],
        out_specs=pl.BlockSpec(memory_space=pltpu.SMEM),
    )(x2d, weight)
    return out[0]


if __name__ == "__main__":
    # Module config (kernel_size must be 1-D for forward to be well defined).
    kernel_size = (8,)          # K = 8
    input_channel = 128         # C = 128 (lane-aligned)
    output_channel = 4          # unused by forward
    padding, stride = 0, 1      # unused by forward

    key = jax.random.PRNGKey(0)
    kx, kw, kb = jax.random.split(key, 3)

    # Deterministic parameter init (stand-in for torch.randn).
    weight = jax.random.normal(kw, (*kernel_size, input_channel), dtype=jnp.float32)
    # TODO(synk): self.bais uses undefined `input_size * output_size` in the
    # original module and is never used in forward; allocate a placeholder.
    bais = jax.random.normal(kb, (input_channel * output_channel,), dtype=jnp.float32)

    # Input: 1-D vector of length C (required by torch.Tensor.dot semantics).
    x = jax.random.normal(kx, (input_channel,), dtype=jnp.float32)

    out = conv2dlayer_forward(x, weight)
    out = jax.block_until_ready(out)

    # Cross-check against pure-JAX reference of the exact forward semantics.
    ref = jnp.float32(input_channel) * jnp.sum(weight @ x)
    assert jnp.allclose(out, ref, rtol=1e-5, atol=1e-3), (out, ref)

    print("KERNEL_OK")
</pallas_src>

<mosaic_0001>
module attributes {stable_mosaic.version = 11 : i64} {
  func.func @_conv2dlayer_kernel(%arg0: memref<1x128xf32, #tpu.memory_space<vmem>>, %arg1: memref<8x128xf32, #tpu.memory_space<vmem>>, %arg2: memref<1xf32, #tpu.memory_space<smem>>) attributes {dimension_semantics = [], scalar_prefetch = 0 : i64, scratch_operands = 0 : i64, tpu.core_type = #tpu.core_type<tc>} {
    %c0 = arith.constant 0 : index
    %c0_0 = arith.constant 0 : index
    %0 = vector.load %arg0[%c0, %c0_0] : memref<1x128xf32, #tpu.memory_space<vmem>>, vector<1x128xf32>
    %c0_1 = arith.constant 0 : index
    %c0_2 = arith.constant 0 : index
    %1 = vector.load %arg1[%c0_1, %c0_2] : memref<8x128xf32, #tpu.memory_space<vmem>>, vector<8x128xf32>
    %cst = arith.constant dense<0.000000e+00> : vector<128xf32>
    %2 = vector.multi_reduction <add>, %1, %cst [0] : vector<8x128xf32> to vector<128xf32>
    %3 = vector.shape_cast %2 : vector<128xf32> to vector<1x128xf32>
    %4 = arith.mulf %0, %3 : vector<1x128xf32>
    %5 = vector.shape_cast %4 : vector<1x128xf32> to vector<1x1x128xf32>
    %cst_3 = arith.constant dense<0.000000e+00> : vector<1xf32>
    %6 = vector.multi_reduction <add>, %5, %cst_3 [1, 2] : vector<1x1x128xf32> to vector<1xf32>
    %7 = vector.shape_cast %6 : vector<1xf32> to vector<1x1x1xf32>
    %8 = vector.extract %7[0, 0, 0] : f32 from vector<1x1x1xf32>
    %cst_4 = arith.constant 1.280000e+02 : f32
    %9 = arith.mulf %cst_4, %8 : f32
    %c0_5 = arith.constant 0 : index
    %10 = memref.load %arg2[%c0_5] : memref<1xf32, #tpu.memory_space<smem>>
    memref.store %9, %arg2[%c0_5] : memref<1xf32, #tpu.memory_space<smem>>
    return
  }
}

</mosaic_0001>

<llo_original>
// kernel: tpu_custom_call.1
$region0: #{tpu_custom_call.1}
  #allocation0 [shape = 'u32[]', space=smem, size = 0x4, offset = 0x4, fixed_abs, tag = 'smem constant byte address 0x4 - core index']
  #allocation1 [shape = 'u32[72,128]{1,0:T(1,128)}', space=vmem, size = 0x9000, scoped, tag = 'internal scratch']
  %s0 = inlined_call_operand.hbm [shape: f32[1,128], index: 0, kind: input, shape index: {}]
  %s1 = inlined_call_operand.hbm [shape: f32[8,128], index: 1, kind: input, shape index: {}]
  %s2 = inlined_call_operand.hbm [shape: f32[1], index: 2, kind: output, shape index: {}]
  %s3 = sld [smem:[#allocation0]]
  $region26: #{tpu_custom_call.1} parent=0
    _
  %s5 = ssub.s32 1, %s3
  %s6 = scalar_select 0, %s5, %s3
  $region1: #{tpu_custom_call.1} parent=0
    #allocation2 [shape = 'u8[512]{0}', space=vmem, size = 0x400, scoped, tag = 'input window, operand 0, single buffered']
    #allocation3 [shape = 's32[1]{0}', space=sflag, size = 0x4, scoped, tag = 'scoped memory for tpu_custom_call.1']
    #allocation4 [shape = 's32[1]{0}', space=sflag, size = 0x4, scoped, tag = 'scoped memory for tpu_custom_call.1']
    #allocation5 [shape = 'u8[4096]{0}', space=vmem, size = 0x1000, scoped, tag = 'input window, operand 1, single buffered']
    #allocation6 [shape = 's32[1]{0}', space=sflag, size = 0x4, scoped, tag = 'scoped memory for tpu_custom_call.1']
    #allocation7 [shape = 'u8[512]{0}', space=smem, size = 0x200, scoped, tag = 'output window, operand 0, single buffered']
    %7 = vsyncpa [#allocation3], 0
    %8 = vsyncpa [#allocation6], 0
    %9 = vsyncpa [#allocation4], 0
    // Predicated region
    $region2: #{tpu_custom_call.1} parent=1 // pred_check
      _
    $region3: #{tpu_custom_call.1} parent=1 // pred_check_branch
      %11 = sbr.rel (0) target = $region5
    $region4: #{tpu_custom_call.1} parent=1 // pred_region
      %13 = vsyncadd [#allocation3], 0
      %s15 = sshll.u32 %s0, 4
      %s16 = int_to_ptr.hbm [resolvable:$true] %s15
      %s17 = sshll.u32 [#allocation2], 4
      %s18 = int_to_ptr.vmem [resolvable:$true] %s17
      %20 = dma.hbm_to_vmem [thread:$0]  %s16, 16, %s18, [#allocation3]
    $region5: #{tpu_custom_call.1} parent=1 // pred_fallthru
      _
    // Predicated region
    $region6: #{tpu_custom_call.1} parent=1 // pred_check
      _
    $region7: #{tpu_custom_call.1} parent=1 // pred_check_branch
      %22 = sbr.rel (0) target = $region9
    $region8: #{tpu_custom_call.1} parent=1 // pred_region
      %24 = vsyncadd [#allocation6], 0
      %s26 = sshll.u32 %s1, 4
      %s27 = int_to_ptr.hbm [resolvable:$true] %s26
      %s28 = sshll.u32 [#allocation5], 4
      %s29 = int_to_ptr.vmem [resolvable:$true] %s28
      %31 = dma.hbm_to_vmem [thread:$0]  %s27, 128, %s29, [#allocation6]
    $region9: #{tpu_custom_call.1} parent=1 // pred_fallthru
      _
    // Predicated region
    $region10: #{tpu_custom_call.1} parent=1 // pred_check
      _
    $region11: #{tpu_custom_call.1} parent=1 // pred_check_branch
      %33 = sbr.rel (0) target = $region13
    $region12: #{tpu_custom_call.1} parent=1 // pred_region
      %35 = dma.done [#allocation3], 16
    $region13: #{tpu_custom_call.1} parent=1 // pred_fallthru
      _
    // Predicated region
    $region14: #{tpu_custom_call.1} parent=1 // pred_check
      _
    $region15: #{tpu_custom_call.1} parent=1 // pred_check_branch
      %37 = sbr.rel (0) target = $region17
    $region16: #{tpu_custom_call.1} parent=1 // pred_region
      %39 = dma.done [#allocation6], 128
    $region17: #{tpu_custom_call.1} parent=1 // pred_fallthru
      _
    %v40 = vld [vmem:[#allocation2] sm:$0x1]
    %v41 = vld [vmem:[#allocation5] sm:$0xff]
    %v42 = vrot.slane %v41, 4
    %v43 = vadd.f32 %v41, %v42
    %v44 = vrot.slane %v43, 2
    %v45 = vadd.f32 %v43, %v44
    %v46 = vrot.slane %v45, 1
    %v47 = vadd.f32 %v45, %v46
    %v48 = vmul.f32 %v40, %v47
    %vm49 = vcmask 1040384
    %v50 = vsel %vm49, %v48, 0.0
    %51 = vadd.xlane.f32.xlu0 %v50
    %v52 = vpop.xlane.xlu0 %51
    %v53 = vrot.slane %v52, 4
    %v54 = vadd.f32 %v52, %v53
    %v55 = vrot.slane %v54, 2
    %v56 = vadd.f32 %v54, %v55
    %v57 = vrot.slane %v56, 1
    %v58 = vadd.f32 %v56, %v57
    %s59 = vtos %v58
    %s60 = smul.f32 %s59, 128.0
    %s61 = scalar_lea.smem [#allocation7], 0
    %62 = sst [smem:[%s61]] %s60
    // Predicated region
    $region18: #{tpu_custom_call.1} parent=1 // pred_check
      _
    $region19: #{tpu_custom_call.1} parent=1 // pred_check_branch
      %64 = sbr.rel (0) target = $region21
    $region20: #{tpu_custom_call.1} parent=1 // pred_region
      %66 = vsyncadd [#allocation4], 0
      %s68 = sshll.u32 %s2, 4
      %s69 = int_to_ptr.hbm [resolvable:$true] %s68
      %71 = dma.smem_to_hbm [#allocation7], 16, %s69, [#allocation4]
    $region21: #{tpu_custom_call.1} parent=1 // pred_fallthru
      _
    // Predicated region
    $region22: #{tpu_custom_call.1} parent=1 // pred_check
      _
    $region23: #{tpu_custom_call.1} parent=1 // pred_check_branch
      %73 = sbr.rel (0) target = $region25
    $region24: #{tpu_custom_call.1} parent=1 // pred_region
      %75 = dma.done [#allocation4], 16
    $region25: #{tpu_custom_call.1} parent=1 // pred_fallthru
      _
    %76 = sfence
    %77 = vsyncpa [#allocation3], 1
    %78 = vsyncpa [#allocation6], 1
    %79 = vsyncpa [#allocation4], 1

</llo_original>
